<compile_context>
chip_gen: v5e
topology: v5e:2x2
jax: 0.10.0
libtpu: 0.0.40
codegen_flags: <defaults>
</compile_context>

<pallas_src>
import math

import jax
import jax.numpy as jnp
import numpy as np
from jax.experimental import pallas as pl
from jax.experimental.pallas import tpu as pltpu

# ---------------- problem sizes (small, consistent with the module) ----------
B, S, H, C = 2, 8, 32, 6          # batch, seq, hidden_size, num_classes
V = 50                            # synthetic vocab
F = 4 * H                         # FFN intermediate (= 128 = one lane tile)
LANE = 128                        # lane width / padded logits width
SUB = 8                           # sublane tile height


# ---------------- parameter-slab layout (static, 8-row aligned) --------------
def _build_layout():
    off, r = {}, 0
    entries = [
        ("seg_emb", 2), ("pos_emb", S),
        ("ln0g", 1), ("ln0b", 1),
        ("wq", H), ("bq", 1),
        ("wk", H), ("bk", 1),
        ("wv", H), ("bv", 1),
        ("wo", H), ("bo", 1),
        ("ln1g", 1), ("ln1b", 1),
        ("w1", H), ("b1", 1),
        ("w2", F), ("b2", 1),
        ("ln2g", 1), ("ln2b", 1),
        ("wp", H), ("bp", 1),
        ("wc", H), ("bc", 1),
    ]
    for name, n in entries:
        off[name] = r
        r += ((n + SUB - 1) // SUB) * SUB
    return off, r


OFF, SLAB_ROWS = _build_layout()          # SLAB_ROWS = 480  (~240 KiB f32)


# ---------------- shared math (used both in-kernel and in the reference) -----
def _layer_norm(x, g, b, eps=1e-12):
    mu = jnp.mean(x, axis=-1, keepdims=True)
    var = jnp.mean((x - mu) ** 2, axis=-1, keepdims=True)
    return (x - mu) * jax.lax.rsqrt(var + eps) * g + b


def _gelu(x):
    # TODO(synk): PyTorch nn.GELU default is the erf form; tanh approx kept
    # (matches the reference below, avoids an erf lowering dependency).
    return 0.5 * x * (1.0 + jnp.tanh(0.7978845608028654 * (x + 0.044715 * x * x * x)))


# ---------------- Pallas kernel ----------------------------------------------
def bert_classifier_kernel(ids_ref, vl_ref, tok_emb_ref, slab_ref, out_ref):
    bs = ids_ref.shape[0]
    vocab, h = tok_emb_ref.shape
    b = vl_ref.shape[0]
    s = bs // b

    def ld(name, rows, cols=h):
        r0 = OFF[name]                         # static python int -> free slice
        return slab_ref[r0:r0 + rows, :cols]

    # ----- fused embedding lookup ---------------------------------------------
    tok = ids_ref[:, 0:1]                      # (bs, 1) i32
    seg = ids_ref[:, 1:2]                      # (bs, 1) i32

    # token embedding as a one-hot matmul (exact gather; fine at V=50)
    onehot = (jax.lax.broadcasted_iota(jnp.int32, (bs, vocab), 1) == tok).astype(jnp.float32)
    tok_e = jnp.dot(onehot, tok_emb_ref[...], preferred_element_type=jnp.float32)

    # segment embedding: 2-way select between the two table rows
    seg_tbl = ld("seg_emb", 2)
    seg_e = jnp.where(seg == 0, seg_tbl[0:1, :], seg_tbl[1:2, :])        # (bs, h)

    # position embedding via broadcast add on the (b, s, h) view (no concat)
    x3 = (tok_e + seg_e).reshape(b, s, h) + ld("pos_emb", s)[None, :, :]
    h0_3 = _layer_norm(x3, ld("ln0g", 1), ld("ln0b", 1))                 # (b, s, h)
    h0 = h0_3.reshape(bs, h)                                             # all rows
    h0_cls = h0_3[:, 0, :]                                               # (b, h) CLS rows

    # ----- self attention: Q on CLS rows only, separate K/V dots ---------------
    q_cls = jnp.dot(h0_cls, ld("wq", h), preferred_element_type=jnp.float32) + ld("bq", 1)
    k = jnp.dot(h0, ld("wk", h), preferred_element_type=jnp.float32) + ld("bk", 1)
    v = jnp.dot(h0, ld("wv", h), preferred_element_type=jnp.float32) + ld("bv", 1)

    q3 = q_cls.reshape(b, 1, h)
    k3 = k.reshape(b, s, h)
    v3 = v.reshape(b, s, h)

    scores = jnp.einsum("bqd,bkd->bqk", q3, k3,
                        preferred_element_type=jnp.float32) * (1.0 / math.sqrt(h))

    # gen_attention_mask(token_ids, valid_length): one vectorized compare
    key_pos = jax.lax.broadcasted_iota(jnp.int32, (b, 1, s), 2)
    vl3 = vl_ref[...].reshape(b, 1, 1)
    scores = jnp.where(key_pos < vl3, scores, jnp.float32(-1e9))

    m = jnp.max(scores, axis=-1, keepdims=True)
    e = jnp.exp(scores - m)
    p = e * pl.reciprocal(jnp.sum(e, axis=-1, keepdims=True), approx=True)  # EUP

    ctx = jnp.einsum("bqk,bkd->bqd", p, v3,
                     preferred_element_type=jnp.float32).reshape(b, h)

    attn_out = jnp.dot(ctx, ld("wo", h), preferred_element_type=jnp.float32) + ld("bo", 1)
    h1 = _layer_norm(h0_cls + attn_out, ld("ln1g", 1), ld("ln1b", 1))       # (b, h)

    # ----- FFN + LN2 + pooler, CLS rows only (position-wise, so exact) ---------
    w1 = slab_ref[OFF["w1"]:OFF["w1"] + h, :]                               # (h, F=128)
    b1 = slab_ref[OFF["b1"]:OFF["b1"] + 1, :]
    ffn = _gelu(jnp.dot(h1, w1, preferred_element_type=jnp.float32) + b1)   # (b, F)
    f2 = jnp.dot(ffn, ld("w2", F), preferred_element_type=jnp.float32) + ld("b2", 1)
    h2 = _layer_norm(h1 + f2, ld("ln2g", 1), ld("ln2b", 1))

    pooled = jnp.tanh(jnp.dot(h2, ld("wp", h), preferred_element_type=jnp.float32)
                      + ld("bp", 1))                                        # (b, h)

    # dropout is identity at inference
    # TODO(synk): training-mode dropout (dr_rate) via pltpu.prng_* not implemented.

    # classifier: full (8, 128) lane/sublane-dense output tile
    pooled_full = jnp.concatenate(
        [pooled, jnp.zeros((out_ref.shape[0] - b, h), jnp.float32)], axis=0)
    wc = slab_ref[OFF["wc"]:OFF["wc"] + h, :]                               # (h, 128)
    bc = slab_ref[OFF["bc"]:OFF["bc"] + 1, :]
    out_ref[...] = jnp.dot(pooled_full, wc, preferred_element_type=jnp.float32) + bc


# ---------------- one-time parameter packing (outside the jitted forward) ----
def pack_params(params):
    slab = np.zeros((SLAB_ROWS, LANE), np.float32)
    for name in ("seg_emb", "pos_emb", "ln0g", "ln0b", "wq", "bq", "wk", "bk",
                 "wv", "bv", "wo", "bo", "ln1g", "ln1b", "w1", "b1", "w2", "b2",
                 "ln2g", "ln2b", "wp", "bp", "wc", "bc"):
        a = np.asarray(params[name], np.float32)
        slab[OFF[name]:OFF[name] + a.shape[0], :a.shape[1]] = a
    return jnp.asarray(params["tok_emb"], jnp.float32), jnp.asarray(slab)


# ---------------- wrapper -----------------------------------------------------
_VMEM = pl.BlockSpec(memory_space=pltpu.MemorySpace.VMEM)


@jax.jit
def classifier_forward(token_ids, valid_length, segment_ids, tok_emb, slab):
    b, s = token_ids.shape
    ids = jnp.stack([token_ids, segment_ids], axis=-1).astype(jnp.int32).reshape(b * s, 2)
    vl = valid_length.astype(jnp.int32).reshape(b, 1)

    out = pl.pallas_call(
        bert_classifier_kernel,
        out_shape=jax.ShapeDtypeStruct((SUB, LANE), jnp.float32),
        in_specs=[_VMEM, _VMEM, _VMEM, _VMEM],
        out_specs=_VMEM,
    )(ids, vl, tok_emb, slab)
    return out[:b, :C]


# ---------------- pure-JAX reference (same math, full/unpruned path) ----------
def reference_forward(token_ids, valid_length, segment_ids, params):
    b, s = token_ids.shape
    x = (params["tok_emb"][token_ids]
         + params["seg_emb"][segment_ids]
         + params["pos_emb"][None, :s, :]).astype(jnp.float32)
    x2 = x.reshape(b * s, H)
    h0 = _layer_norm(x2, params["ln0g"], params["ln0b"])
    q = (h0 @ params["wq"] + params["bq"]).reshape(b, s, H)
    k = (h0 @ params["wk"] + params["bk"]).reshape(b, s, H)
    v = (h0 @ params["wv"] + params["bv"]).reshape(b, s, H)
    scores = jnp.einsum("bqd,bkd->bqk", q, k) / jnp.sqrt(jnp.float32(H))
    key_pos = jnp.arange(s, dtype=jnp.float32)[None, None, :]
    attn_mask = (key_pos < valid_length.astype(jnp.float32)[:, None, None]).astype(jnp.float32)
    scores = scores + (attn_mask - 1.0) * 1e9
    m = jnp.max(scores, axis=-1, keepdims=True)
    e = jnp.exp(scores - m)
    p = e / jnp.sum(e, axis=-1, keepdims=True)
    ctx = jnp.einsum("bqk,bkd->bqd", p, v).reshape(b * s, H)
    attn_out = ctx @ params["wo"] + params["bo"]
    h1 = _layer_norm(h0 + attn_out, params["ln1g"], params["ln1b"])
    f = _gelu(h1 @ params["w1"] + params["b1"])
    f2 = f @ params["w2"] + params["b2"]
    h2 = _layer_norm(h1 + f2, params["ln2g"], params["ln2b"])
    cls = h2.reshape(b, s, H)[:, 0, :]
    pooled = jnp.tanh(cls @ params["wp"] + params["bp"])
    return pooled @ params["wc"] + params["bc"]


# ---------------- deterministic parameter init --------------------------------
def init_params(key):
    ks = jax.random.split(key, 12)
    nrm = lambda k, shp, sc=0.05: sc * jax.random.normal(k, shp, jnp.float32)
    return {
        "tok_emb": nrm(ks[0], (V, H)),
        "seg_emb": nrm(ks[1], (2, H)),
        "pos_emb": nrm(ks[2], (S, H)),
        "ln0g": jnp.ones((1, H), jnp.float32), "ln0b": jnp.zeros((1, H), jnp.float32),
        "wq": nrm(ks[3], (H, H)), "bq": jnp.zeros((1, H), jnp.float32),
        "wk": nrm(ks[4], (H, H)), "bk": jnp.zeros((1, H), jnp.float32),
        "wv": nrm(ks[5], (H, H)), "bv": jnp.zeros((1, H), jnp.float32),
        "wo": nrm(ks[6], (H, H)), "bo": jnp.zeros((1, H), jnp.float32),
        "ln1g": jnp.ones((1, H), jnp.float32), "ln1b": jnp.zeros((1, H), jnp.float32),
        "w1": nrm(ks[7], (H, F)), "b1": jnp.zeros((1, F), jnp.float32),
        "w2": nrm(ks[8], (F, H)), "b2": jnp.zeros((1, H), jnp.float32),
        "ln2g": jnp.ones((1, H), jnp.float32), "ln2b": jnp.zeros((1, H), jnp.float32),
        "wp": nrm(ks[9], (H, H)), "bp": jnp.zeros((1, H), jnp.float32),
        "wc": nrm(ks[10], (H, C)), "bc": jnp.zeros((1, C), jnp.float32),
    }


if __name__ == "__main__":
    key = jax.random.PRNGKey(0)
    k_tok, k_seg, k_par = jax.random.split(key, 3)

    token_ids = jax.random.randint(k_tok, (B, S), 0, V, dtype=jnp.int32)
    segment_ids = jax.random.randint(k_seg, (B, S), 0, 2, dtype=jnp.int32)
    valid_length = jnp.array([5, 8], dtype=jnp.int32)

    params = init_params(k_par)
    tok_emb, slab = pack_params(params)        # one-time packing, outside jit

    logits = classifier_forward(token_ids, valid_length, segment_ids, tok_emb, slab)
    logits = jax.block_until_ready(logits)

    ref = reference_forward(token_ids, valid_length, segment_ids, params)
    assert logits.shape == (B, C)
    assert bool(jnp.all(jnp.isfinite(logits)))
    np.testing.assert_allclose(np.asarray(logits), np.asarray(ref), rtol=1e-3, atol=1e-3)

    print("KERNEL_OK")
</pallas_src>

<mosaic_0001>
module attributes {stable_mosaic.version = 11 : i64} {
  func.func @bert_classifier_kernel(%arg0: memref<16x2xi32, #tpu.memory_space<vmem>>, %arg1: memref<2x1xi32, #tpu.memory_space<vmem>>, %arg2: memref<50x32xf32, #tpu.memory_space<vmem>>, %arg3: memref<480x128xf32, #tpu.memory_space<vmem>>, %arg4: memref<8x128xf32, #tpu.memory_space<vmem>>) attributes {dimension_semantics = [], scalar_prefetch = 0 : i64, scratch_operands = 0 : i64, tpu.core_type = #tpu.core_type<tc>} {
    %c0 = arith.constant 0 : index
    %c0_0 = arith.constant 0 : index
    %0 = vector.load %arg0[%c0, %c0_0] : memref<16x2xi32, #tpu.memory_space<vmem>>, vector<16x1xi32>
    %c0_1 = arith.constant 0 : index
    %c1 = arith.constant 1 : index
    %1 = vector.load %arg0[%c0_1, %c1] : memref<16x2xi32, #tpu.memory_space<vmem>>, vector<16x1xi32>
    %2 = tpu.iota {dimensions = array<i32: 1>} : vector<16x50xi32>
    %3 = vector.broadcast %0 : vector<16x1xi32> to vector<16x50xi32>
    %4 = arith.cmpi eq, %2, %3 : vector<16x50xi32>
    %5 = arith.extui %4 : vector<16x50xi1> to vector<16x50xi32>
    %6 = arith.sitofp %5 : vector<16x50xi32> to vector<16x50xf32>
    %c0_2 = arith.constant 0 : index
    %c0_3 = arith.constant 0 : index
    %7 = vector.load %arg2[%c0_2, %c0_3] : memref<50x32xf32, #tpu.memory_space<vmem>>, vector<50x32xf32>
    %cst = arith.constant dense<0.000000e+00> : vector<16x32xf32>
    %8 = tpu.matmul %6, %7, %cst {dimension_numbers = #tpu.dot_dimension_numbers<[1], [0], [0], [1], [0, 0, 1, 1], [], []>} : vector<16x50xf32>, vector<50x32xf32>, vector<16x32xf32> -> vector<16x32xf32>
    %c0_4 = arith.constant 0 : index
    %c0_5 = arith.constant 0 : index
    %9 = vector.load %arg3[%c0_4, %c0_5] : memref<480x128xf32, #tpu.memory_space<vmem>>, vector<2x32xf32>
    %c0_i32 = arith.constant 0 : i32
    %10 = vector.broadcast %c0_i32 : i32 to vector<16x1xi32>
    %11 = arith.cmpi eq, %1, %10 : vector<16x1xi32>
    %12 = vector.extract_strided_slice %9 {offsets = [0, 0], sizes = [1, 32], strides = [1, 1]} : vector<2x32xf32> to vector<1x32xf32>
    %13 = vector.extract_strided_slice %9 {offsets = [1, 0], sizes = [1, 32], strides = [1, 1]} : vector<2x32xf32> to vector<1x32xf32>
    %14 = vector.shape_cast %11 : vector<16x1xi1> to vector<16x1xi1>
    %15 = vector.broadcast %14 : vector<16x1xi1> to vector<16x32xi1>
    %16 = vector.shape_cast %12 : vector<1x32xf32> to vector<1x32xf32>
    %17 = vector.broadcast %16 : vector<1x32xf32> to vector<16x32xf32>
    %18 = vector.shape_cast %13 : vector<1x32xf32> to vector<1x32xf32>
    %19 = vector.broadcast %18 : vector<1x32xf32> to vector<16x32xf32>
    %20 = arith.select %15, %17, %19 : vector<16x32xi1>, vector<16x32xf32>
    %21 = arith.addf %8, %20 : vector<16x32xf32>
    %22 = vector.shape_cast %21 : vector<16x32xf32> to vector<2x8x32xf32>
    %c8 = arith.constant 8 : index
    %c0_6 = arith.constant 0 : index
    %23 = vector.load %arg3[%c8, %c0_6] : memref<480x128xf32, #tpu.memory_space<vmem>>, vector<8x32xf32>
    %24 = vector.shape_cast %23 : vector<8x32xf32> to vector<1x8x32xf32>
    %25 = vector.broadcast %24 : vector<1x8x32xf32> to vector<2x8x32xf32>
    %26 = arith.addf %22, %25 : vector<2x8x32xf32>
    %c16 = arith.constant 16 : index
    %c0_7 = arith.constant 0 : index
    %27 = vector.load %arg3[%c16, %c0_7] : memref<480x128xf32, #tpu.memory_space<vmem>>, vector<1x32xf32>
    %c24 = arith.constant 24 : index
    %c0_8 = arith.constant 0 : index
    %28 = vector.load %arg3[%c24, %c0_8] : memref<480x128xf32, #tpu.memory_space<vmem>>, vector<1x32xf32>
    %cst_9 = arith.constant dense<0.000000e+00> : vector<2x8xf32>
    %29 = vector.multi_reduction <add>, %26, %cst_9 [2] : vector<2x8x32xf32> to vector<2x8xf32>
    %30 = vector.shape_cast %29 : vector<2x8xf32> to vector<2x8x1xf32>
    %cst_10 = arith.constant 3.200000e+01 : f32
    %31 = vector.broadcast %cst_10 : f32 to vector<2x8x1xf32>
    %32 = arith.divf %30, %31 : vector<2x8x1xf32>
    %33 = vector.broadcast %32 : vector<2x8x1xf32> to vector<2x8x32xf32>
    %34 = arith.subf %26, %33 : vector<2x8x32xf32>
    %35 = arith.mulf %34, %34 : vector<2x8x32xf32>
    %cst_11 = arith.constant dense<0.000000e+00> : vector<2x8xf32>
    %36 = vector.multi_reduction <add>, %35, %cst_11 [2] : vector<2x8x32xf32> to vector<2x8xf32>
    %37 = vector.shape_cast %36 : vector<2x8xf32> to vector<2x8x1xf32>
    %cst_12 = arith.constant 3.200000e+01 : f32
    %38 = vector.broadcast %cst_12 : f32 to vector<2x8x1xf32>
    %39 = arith.divf %37, %38 : vector<2x8x1xf32>
    %40 = vector.broadcast %32 : vector<2x8x1xf32> to vector<2x8x32xf32>
    %41 = arith.subf %26, %40 : vector<2x8x32xf32>
    %cst_13 = arith.constant 9.99999996E-13 : f32
    %42 = vector.broadcast %cst_13 : f32 to vector<2x8x1xf32>
    %43 = arith.addf %39, %42 : vector<2x8x1xf32>
    %44 = math.rsqrt %43 : vector<2x8x1xf32>
    %45 = vector.broadcast %44 : vector<2x8x1xf32> to vector<2x8x32xf32>
    %46 = arith.mulf %41, %45 : vector<2x8x32xf32>
    %47 = vector.shape_cast %27 : vector<1x32xf32> to vector<1x1x32xf32>
    %48 = vector.broadcast %47 : vector<1x1x32xf32> to vector<2x8x32xf32>
    %49 = arith.mulf %46, %48 : vector<2x8x32xf32>
    %50 = vector.shape_cast %28 : vector<1x32xf32> to vector<1x1x32xf32>
    %51 = vector.broadcast %50 : vector<1x1x32xf32> to vector<2x8x32xf32>
    %52 = arith.addf %49, %51 : vector<2x8x32xf32>
    %53 = vector.shape_cast %52 : vector<2x8x32xf32> to vector<16x32xf32>
    %54 = vector.extract_strided_slice %52 {offsets = [0, 0, 0], sizes = [2, 1, 32], strides = [1, 1, 1]} : vector<2x8x32xf32> to vector<2x1x32xf32>
    %55 = vector.shape_cast %54 : vector<2x1x32xf32> to vector<2x32xf32>
    %c32 = arith.constant 32 : index
    %c0_14 = arith.constant 0 : index
    %56 = vector.load %arg3[%c32, %c0_14] : memref<480x128xf32, #tpu.memory_space<vmem>>, vector<32x32xf32>
    %cst_15 = arith.constant dense<0.000000e+00> : vector<2x32xf32>
    %57 = tpu.matmul %55, %56, %cst_15 {dimension_numbers = #tpu.dot_dimension_numbers<[1], [0], [0], [1], [0, 0, 1, 1], [], []>} : vector<2x32xf32>, vector<32x32xf32>, vector<2x32xf32> -> vector<2x32xf32>
    %c64 = arith.constant 64 : index
    %c0_16 = arith.constant 0 : index
    %58 = vector.load %arg3[%c64, %c0_16] : memref<480x128xf32, #tpu.memory_space<vmem>>, vector<1x32xf32>
    %59 = vector.broadcast %58 : vector<1x32xf32> to vector<2x32xf32>
    %60 = arith.addf %57, %59 : vector<2x32xf32>
    %c72 = arith.constant 72 : index
    %c0_17 = arith.constant 0 : index
    %61 = vector.load %arg3[%c72, %c0_17] : memref<480x128xf32, #tpu.memory_space<vmem>>, vector<32x32xf32>
    %cst_18 = arith.constant dense<0.000000e+00> : vector<16x32xf32>
    %62 = tpu.matmul %53, %61, %cst_18 {dimension_numbers = #tpu.dot_dimension_numbers<[1], [0], [0], [1], [0, 0, 1, 1], [], []>} : vector<16x32xf32>, vector<32x32xf32>, vector<16x32xf32> -> vector<16x32xf32>
    %c104 = arith.constant 104 : index
    %c0_19 = arith.constant 0 : index
    %63 = vector.load %arg3[%c104, %c0_19] : memref<480x128xf32, #tpu.memory_space<vmem>>, vector<1x32xf32>
    %64 = vector.broadcast %63 : vector<1x32xf32> to vector<16x32xf32>
    %65 = arith.addf %62, %64 : vector<16x32xf32>
    %c112 = arith.constant 112 : index
    %c0_20 = arith.constant 0 : index
    %66 = vector.load %arg3[%c112, %c0_20] : memref<480x128xf32, #tpu.memory_space<vmem>>, vector<32x32xf32>
    %cst_21 = arith.constant dense<0.000000e+00> : vector<16x32xf32>
    %67 = tpu.matmul %53, %66, %cst_21 {dimension_numbers = #tpu.dot_dimension_numbers<[1], [0], [0], [1], [0, 0, 1, 1], [], []>} : vector<16x32xf32>, vector<32x32xf32>, vector<16x32xf32> -> vector<16x32xf32>
    %c144 = arith.constant 144 : index
    %c0_22 = arith.constant 0 : index
    %68 = vector.load %arg3[%c144, %c0_22] : memref<480x128xf32, #tpu.memory_space<vmem>>, vector<1x32xf32>
    %69 = vector.broadcast %68 : vector<1x32xf32> to vector<16x32xf32>
    %70 = arith.addf %67, %69 : vector<16x32xf32>
    %71 = vector.shape_cast %60 : vector<2x32xf32> to vector<2x1x32xf32>
    %72 = vector.shape_cast %65 : vector<16x32xf32> to vector<2x8x32xf32>
    %73 = vector.shape_cast %70 : vector<16x32xf32> to vector<2x8x32xf32>
    "tpu.trace_start"() <{level = 10 : i32, message = "bqd,bkd->bqk"}> : () -> ()
    %cst_23 = arith.constant dense<0.000000e+00> : vector<2x1x8xf32>
    %74 = tpu.matmul %71, %72, %cst_23 {dimension_numbers = #tpu.dot_dimension_numbers<[2], [2], [1], [1], [0, 0, 0, 1, 1, 1], [0], [0]>} : vector<2x1x32xf32>, vector<2x8x32xf32>, vector<2x1x8xf32> -> vector<2x1x8xf32>
    "tpu.trace_stop"() : () -> ()
    %cst_24 = arith.constant 0.176776692 : f32
    %75 = vector.broadcast %cst_24 : f32 to vector<2x1x8xf32>
    %76 = arith.mulf %74, %75 : vector<2x1x8xf32>
    %77 = tpu.iota {dimensions = array<i32: 2>} : vector<2x1x8xi32>
    %c0_25 = arith.constant 0 : index
    %c0_26 = arith.constant 0 : index
    %78 = vector.load %arg1[%c0_25, %c0_26] : memref<2x1xi32, #tpu.memory_space<vmem>>, vector<2x1xi32>
    %79 = vector.shape_cast %78 : vector<2x1xi32> to vector<2x1x1xi32>
    %80 = vector.broadcast %79 : vector<2x1x1xi32> to vector<2x1x8xi32>
    %81 = arith.cmpi slt, %77, %80 : vector<2x1x8xi32>
    %cst_27 = arith.constant -1.000000e+09 : f32
    %82 = vector.broadcast %cst_27 : f32 to vector<2x1x8xf32>
    %83 = arith.select %81, %76, %82 : vector<2x1x8xi1>, vector<2x1x8xf32>
    %cst_28 = arith.constant dense<0xFF800000> : vector<2x1xf32>
    %84 = vector.multi_reduction <maximumf>, %83, %cst_28 [2] : vector<2x1x8xf32> to vector<2x1xf32>
    %85 = vector.shape_cast %84 : vector<2x1xf32> to vector<2x1x1xf32>
    %86 = vector.broadcast %85 : vector<2x1x1xf32> to vector<2x1x8xf32>
    %87 = arith.subf %83, %86 : vector<2x1x8xf32>
    %88 = math.exp %87 : vector<2x1x8xf32>
    %cst_29 = arith.constant dense<0.000000e+00> : vector<2x1xf32>
    %89 = vector.multi_reduction <add>, %88, %cst_29 [2] : vector<2x1x8xf32> to vector<2x1xf32>
    %90 = vector.shape_cast %89 : vector<2x1xf32> to vector<2x1x1xf32>
    %91 = tpu.reciprocal %90 {approx = true} : vector<2x1x1xf32> -> vector<2x1x1xf32>
    %92 = vector.broadcast %91 : vector<2x1x1xf32> to vector<2x1x8xf32>
    %93 = arith.mulf %88, %92 : vector<2x1x8xf32>
    "tpu.trace_start"() <{level = 10 : i32, message = "bqk,bkd->bqd"}> : () -> ()
    %cst_30 = arith.constant dense<0.000000e+00> : vector<2x1x32xf32>
    %94 = tpu.matmul %93, %73, %cst_30 {dimension_numbers = #tpu.dot_dimension_numbers<[2], [1], [1], [2], [0, 0, 0, 1, 1, 2], [0], [0]>} : vector<2x1x8xf32>, vector<2x8x32xf32>, vector<2x1x32xf32> -> vector<2x1x32xf32>
    "tpu.trace_stop"() : () -> ()
    %95 = vector.shape_cast %94 : vector<2x1x32xf32> to vector<2x32xf32>
    %c152 = arith.constant 152 : index
    %c0_31 = arith.constant 0 : index
    %96 = vector.load %arg3[%c152, %c0_31] : memref<480x128xf32, #tpu.memory_space<vmem>>, vector<32x32xf32>
    %cst_32 = arith.constant dense<0.000000e+00> : vector<2x32xf32>
    %97 = tpu.matmul %95, %96, %cst_32 {dimension_numbers = #tpu.dot_dimension_numbers<[1], [0], [0], [1], [0, 0, 1, 1], [], []>} : vector<2x32xf32>, vector<32x32xf32>, vector<2x32xf32> -> vector<2x32xf32>
    %c184 = arith.constant 184 : index
    %c0_33 = arith.constant 0 : index
    %98 = vector.load %arg3[%c184, %c0_33] : memref<480x128xf32, #tpu.memory_space<vmem>>, vector<1x32xf32>
    %99 = vector.broadcast %98 : vector<1x32xf32> to vector<2x32xf32>
    %100 = arith.addf %97, %99 : vector<2x32xf32>
    %101 = arith.addf %55, %100 : vector<2x32xf32>
    %c192 = arith.constant 192 : index
    %c0_34 = arith.constant 0 : index
    %102 = vector.load %arg3[%c192, %c0_34] : memref<480x128xf32, #tpu.memory_space<vmem>>, vector<1x32xf32>
    %c200 = arith.constant 200 : index
    %c0_35 = arith.constant 0 : index
    %103 = vector.load %arg3[%c200, %c0_35] : memref<480x128xf32, #tpu.memory_space<vmem>>, vector<1x32xf32>
    %cst_36 = arith.constant dense<0.000000e+00> : vector<2xf32>
    %104 = vector.multi_reduction <add>, %101, %cst_36 [1] : vector<2x32xf32> to vector<2xf32>
    %105 = vector.shape_cast %104 : vector<2xf32> to vector<2x1xf32>
    %cst_37 = arith.constant 3.200000e+01 : f32
    %106 = vector.broadcast %cst_37 : f32 to vector<2x1xf32>
    %107 = arith.divf %105, %106 : vector<2x1xf32>
    %108 = vector.broadcast %107 : vector<2x1xf32> to vector<2x32xf32>
    %109 = arith.subf %101, %108 : vector<2x32xf32>
    %110 = arith.mulf %109, %109 : vector<2x32xf32>
    %cst_38 = arith.constant dense<0.000000e+00> : vector<2xf32>
    %111 = vector.multi_reduction <add>, %110, %cst_38 [1] : vector<2x32xf32> to vector<2xf32>
    %112 = vector.shape_cast %111 : vector<2xf32> to vector<2x1xf32>
    %cst_39 = arith.constant 3.200000e+01 : f32
    %113 = vector.broadcast %cst_39 : f32 to vector<2x1xf32>
    %114 = arith.divf %112, %113 : vector<2x1xf32>
    %115 = vector.broadcast %107 : vector<2x1xf32> to vector<2x32xf32>
    %116 = arith.subf %101, %115 : vector<2x32xf32>
    %cst_40 = arith.constant 9.99999996E-13 : f32
    %117 = vector.broadcast %cst_40 : f32 to vector<2x1xf32>
    %118 = arith.addf %114, %117 : vector<2x1xf32>
    %119 = math.rsqrt %118 : vector<2x1xf32>
    %120 = vector.broadcast %119 : vector<2x1xf32> to vector<2x32xf32>
    %121 = arith.mulf %116, %120 : vector<2x32xf32>
    %122 = vector.broadcast %102 : vector<1x32xf32> to vector<2x32xf32>
    %123 = arith.mulf %121, %122 : vector<2x32xf32>
    %124 = vector.broadcast %103 : vector<1x32xf32> to vector<2x32xf32>
    %125 = arith.addf %123, %124 : vector<2x32xf32>
    %c208 = arith.constant 208 : index
    %c0_41 = arith.constant 0 : index
    %126 = vector.load %arg3[%c208, %c0_41] : memref<480x128xf32, #tpu.memory_space<vmem>>, vector<32x128xf32>
    %c240 = arith.constant 240 : index
    %c0_42 = arith.constant 0 : index
    %127 = vector.load %arg3[%c240, %c0_42] : memref<480x128xf32, #tpu.memory_space<vmem>>, vector<1x128xf32>
    %cst_43 = arith.constant dense<0.000000e+00> : vector<2x128xf32>
    %128 = tpu.matmul %125, %126, %cst_43 {dimension_numbers = #tpu.dot_dimension_numbers<[1], [0], [0], [1], [0, 0, 1, 1], [], []>} : vector<2x32xf32>, vector<32x128xf32>, vector<2x128xf32> -> vector<2x128xf32>
    %129 = vector.broadcast %127 : vector<1x128xf32> to vector<2x128xf32>
    %130 = arith.addf %128, %129 : vector<2x128xf32>
    %cst_44 = arith.constant 5.000000e-01 : f32
    %131 = vector.broadcast %cst_44 : f32 to vector<2x128xf32>
    %132 = arith.mulf %131, %130 : vector<2x128xf32>
    %cst_45 = arith.constant 4.471500e-02 : f32
    %133 = vector.broadcast %cst_45 : f32 to vector<2x128xf32>
    %134 = arith.mulf %133, %130 : vector<2x128xf32>
    %135 = arith.mulf %134, %130 : vector<2x128xf32>
    %136 = arith.mulf %135, %130 : vector<2x128xf32>
    %137 = arith.addf %130, %136 : vector<2x128xf32>
    %cst_46 = arith.constant 0.797884583 : f32
    %138 = vector.broadcast %cst_46 : f32 to vector<2x128xf32>
    %139 = arith.mulf %138, %137 : vector<2x128xf32>
    %140 = math.tanh %139 : vector<2x128xf32>
    %cst_47 = arith.constant 1.000000e+00 : f32
    %141 = vector.broadcast %cst_47 : f32 to vector<2x128xf32>
    %142 = arith.addf %141, %140 : vector<2x128xf32>
    %143 = arith.mulf %132, %142 : vector<2x128xf32>
    %c248 = arith.constant 248 : index
    %c0_48 = arith.constant 0 : index
    %144 = vector.load %arg3[%c248, %c0_48] : memref<480x128xf32, #tpu.memory_space<vmem>>, vector<128x32xf32>
    %cst_49 = arith.constant dense<0.000000e+00> : vector<2x32xf32>
    %145 = tpu.matmul %143, %144, %cst_49 {dimension_numbers = #tpu.dot_dimension_numbers<[1], [0], [0], [1], [0, 0, 1, 1], [], []>} : vector<2x128xf32>, vector<128x32xf32>, vector<2x32xf32> -> vector<2x32xf32>
    %c376 = arith.constant 376 : index
    %c0_50 = arith.constant 0 : index
    %146 = vector.load %arg3[%c376, %c0_50] : memref<480x128xf32, #tpu.memory_space<vmem>>, vector<1x32xf32>
    %147 = vector.broadcast %146 : vector<1x32xf32> to vector<2x32xf32>
    %148 = arith.addf %145, %147 : vector<2x32xf32>
    %149 = arith.addf %125, %148 : vector<2x32xf32>
    %c384 = arith.constant 384 : index
    %c0_51 = arith.constant 0 : index
    %150 = vector.load %arg3[%c384, %c0_51] : memref<480x128xf32, #tpu.memory_space<vmem>>, vector<1x32xf32>
    %c392 = arith.constant 392 : index
    %c0_52 = arith.constant 0 : index
    %151 = vector.load %arg3[%c392, %c0_52] : memref<480x128xf32, #tpu.memory_space<vmem>>, vector<1x32xf32>
    %cst_53 = arith.constant dense<0.000000e+00> : vector<2xf32>
    %152 = vector.multi_reduction <add>, %149, %cst_53 [1] : vector<2x32xf32> to vector<2xf32>
    %153 = vector.shape_cast %152 : vector<2xf32> to vector<2x1xf32>
    %cst_54 = arith.constant 3.200000e+01 : f32
    %154 = vector.broadcast %cst_54 : f32 to vector<2x1xf32>
    %155 = arith.divf %153, %154 : vector<2x1xf32>
    %156 = vector.broadcast %155 : vector<2x1xf32> to vector<2x32xf32>
    %157 = arith.subf %149, %156 : vector<2x32xf32>
    %158 = arith.mulf %157, %157 : vector<2x32xf32>
    %cst_55 = arith.constant dense<0.000000e+00> : vector<2xf32>
    %159 = vector.multi_reduction <add>, %158, %cst_55 [1] : vector<2x32xf32> to vector<2xf32>
    %160 = vector.shape_cast %159 : vector<2xf32> to vector<2x1xf32>
    %cst_56 = arith.constant 3.200000e+01 : f32
    %161 = vector.broadcast %cst_56 : f32 to vector<2x1xf32>
    %162 = arith.divf %160, %161 : vector<2x1xf32>
    %163 = vector.broadcast %155 : vector<2x1xf32> to vector<2x32xf32>
    %164 = arith.subf %149, %163 : vector<2x32xf32>
    %cst_57 = arith.constant 9.99999996E-13 : f32
    %165 = vector.broadcast %cst_57 : f32 to vector<2x1xf32>
    %166 = arith.addf %162, %165 : vector<2x1xf32>
    %167 = math.rsqrt %166 : vector<2x1xf32>
    %168 = vector.broadcast %167 : vector<2x1xf32> to vector<2x32xf32>
    %169 = arith.mulf %164, %168 : vector<2x32xf32>
    %170 = vector.broadcast %150 : vector<1x32xf32> to vector<2x32xf32>
    %171 = arith.mulf %169, %170 : vector<2x32xf32>
    %172 = vector.broadcast %151 : vector<1x32xf32> to vector<2x32xf32>
    %173 = arith.addf %171, %172 : vector<2x32xf32>
    %c400 = arith.constant 400 : index
    %c0_58 = arith.constant 0 : index
    %174 = vector.load %arg3[%c400, %c0_58] : memref<480x128xf32, #tpu.memory_space<vmem>>, vector<32x32xf32>
    %cst_59 = arith.constant dense<0.000000e+00> : vector<2x32xf32>
    %175 = tpu.matmul %173, %174, %cst_59 {dimension_numbers = #tpu.dot_dimension_numbers<[1], [0], [0], [1], [0, 0, 1, 1], [], []>} : vector<2x32xf32>, vector<32x32xf32>, vector<2x32xf32> -> vector<2x32xf32>
    %c432 = arith.constant 432 : index
    %c0_60 = arith.constant 0 : index
    %176 = vector.load %arg3[%c432, %c0_60] : memref<480x128xf32, #tpu.memory_space<vmem>>, vector<1x32xf32>
    %177 = vector.broadcast %176 : vector<1x32xf32> to vector<2x32xf32>
    %178 = arith.addf %175, %177 : vector<2x32xf32>
    %179 = math.tanh %178 : vector<2x32xf32>
    %cst_61 = arith.constant 0.000000e+00 : f32
    %180 = vector.broadcast %cst_61 : f32 to vector<6x32xf32>
    %181 = tpu.concatenate %179, %180 in 0 : vector<2x32xf32>, vector<6x32xf32> -> vector<8x32xf32>
    %c440 = arith.constant 440 : index
    %c0_62 = arith.constant 0 : index
    %182 = vector.load %arg3[%c440, %c0_62] : memref<480x128xf32, #tpu.memory_space<vmem>>, vector<32x128xf32>
    %c472 = arith.constant 472 : index
    %c0_63 = arith.constant 0 : index
    %183 = vector.load %arg3[%c472, %c0_63] : memref<480x128xf32, #tpu.memory_space<vmem>>, vector<1x128xf32>
    %cst_64 = arith.constant dense<0.000000e+00> : vector<8x128xf32>
    %184 = tpu.matmul %181, %182, %cst_64 {dimension_numbers = #tpu.dot_dimension_numbers<[1], [0], [0], [1], [0, 0, 1, 1], [], []>} : vector<8x32xf32>, vector<32x128xf32>, vector<8x128xf32> -> vector<8x128xf32>
    %185 = vector.broadcast %183 : vector<1x128xf32> to vector<8x128xf32>
    %186 = arith.addf %184, %185 : vector<8x128xf32>
    %c0_65 = arith.constant 0 : index
    %c0_66 = arith.constant 0 : index
    %187 = vector.load %arg4[%c0_65, %c0_66] : memref<8x128xf32, #tpu.memory_space<vmem>>, vector<8x128xf32>
    tpu.vector_store %arg4[%c0_65, %c0_66], %186 {strides = array<i32>} : memref<8x128xf32, #tpu.memory_space<vmem>>, vector<8x128xf32>,
    return
  }
}

</mosaic_0001>

<llo_original>
// kernel: classifier_forward.1
$region0: #{classifier_forward.1}
  #allocation0 [shape = 'u32[]', space=smem, size = 0x4, offset = 0x4, fixed_abs, tag = 'smem constant byte address 0x4 - core index']
  #allocation1 [shape = 'u32[72,128]{1,0:T(1,128)}', space=vmem, size = 0x9000, scoped, tag = 'internal scratch']
  %s0 = inlined_call_operand.vmem [shape: s32[16,2], index: 0, kind: input, shape index: {}]
  %s1 = inlined_call_operand.vmem [shape: s32[2,1], index: 1, kind: input, shape index: {}]
  %s2 = inlined_call_operand.vmem [shape: f32[50,32], index: 2, kind: input, shape index: {}]
  %s3 = inlined_call_operand.hbm [shape: f32[480,128], index: 3, kind: input, shape index: {}]
  %s4 = inlined_call_operand.vmem [shape: f32[8,128], index: 4, kind: output, shape index: {}]
  %s5 = sld [smem:[#allocation0]]
  $region30: #{classifier_forward.1} parent=0
    _
  %s7 = ssub.s32 1, %s5
  %s8 = scalar_select 0, %s7, %s5
  $region1: #{classifier_forward.1} parent=0
    #allocation2 [shape = 'u8[245760]{0}', space=vmem, size = 0x3c000, scoped, tag = 'input window, operand 3, single buffered']
    #allocation3 [shape = 's32[1]{0}', space=sflag, size = 0x4, scoped, tag = 'scoped memory for classifier_forward.1']
    %9 = vsyncpa [#allocation3], 0
    // Predicated region
    $region2: #{classifier_forward.1} parent=1 // pred_check
      _
    $region3: #{classifier_forward.1} parent=1 // pred_check_branch
      %11 = sbr.rel (0) target = $region5
    $region4: #{classifier_forward.1} parent=1 // pred_region
      _
    $region5: #{classifier_forward.1} parent=1 // pred_fallthru
      _
    // Predicated region
    $region6: #{classifier_forward.1} parent=1 // pred_check
      _
    $region7: #{classifier_forward.1} parent=1 // pred_check_branch
      %13 = sbr.rel (0) target = $region9
    $region8: #{classifier_forward.1} parent=1 // pred_region
      _
    $region9: #{classifier_forward.1} parent=1 // pred_fallthru
      _
    // Predicated region
    $region10: #{classifier_forward.1} parent=1 // pred_check
      _
    $region11: #{classifier_forward.1} parent=1 // pred_check_branch
      %15 = sbr.rel (0) target = $region13
    $region12: #{classifier_forward.1} parent=1 // pred_region
      _
    $region13: #{classifier_forward.1} parent=1 // pred_fallthru
      _
    // Predicated region
    $region14: #{classifier_forward.1} parent=1 // pred_check
      _
    $region15: #{classifier_forward.1} parent=1 // pred_check_branch
      %17 = sbr.rel (0) target = $region17
    $region16: #{classifier_forward.1} parent=1 // pred_region
      %19 = vsyncadd [#allocation3], 0
      %s20 = sshll.u32 %s3, 4
      %s21 = int_to_ptr.hbm [resolvable:$true] %s20
      %s22 = sshll.u32 [#allocation2], 4
      %s23 = int_to_ptr.vmem [resolvable:$true] %s22
      %28 = dma.hbm_to_vmem [thread:$0]  %s21, 7680, %s23, [#allocation3], 128, 128, 8
    $region17: #{classifier_forward.1} parent=1 // pred_fallthru
      _
    // Predicated region
    $region18: #{classifier_forward.1} parent=1 // pred_check
      _
    $region19: #{classifier_forward.1} parent=1 // pred_check_branch
      %30 = sbr.rel (0) target = $region21
    $region20: #{classifier_forward.1} parent=1 // pred_region
      %32 = dma.done [#allocation3], 7680
    $region21: #{classifier_forward.1} parent=1 // pred_fallthru
      _
    %v33 = vld [vmem:[%s0] sm:$0xff]
    %v34 = vld [vmem:[%s0 + $0x8] sm:$0xff]
    %v35 = vlaneseq
    %v36 = vand.u32 %v35, 127
    %37 = vset.pattern.permute.xlu0 0
    %38 = vperm.xlu0 %37, %v33
    %v39 = vpop.permute.xlu0 %38
    %40 = vset.pattern.permute.xlu0 0
    %41 = vperm.xlu0 %40, %v34
    %v42 = vpop.permute.xlu0 %41
    %vm43 = vcmp.eq.s32.totalorder %v36, %v39
    %vm44 = vcmp.eq.s32.totalorder %v36, %v42
    %v45 = vsel %vm43, 1, 0
    %v46 = vsel %vm44, 1, 0
    %v47 = vcvt.s32.f32 %v45
    %v48 = vcvt.s32.f32 %v46
    %v49 = vld [vmem:[%s2] sm:$0xff]
    %v50 = vld [vmem:[%s2 + $0x8] sm:$0xff]
    %v51 = vld [vmem:[%s2 + $0x10] sm:$0xff]
    %v52 = vld [vmem:[%s2 + $0x18] sm:$0xff]
    %v53 = vld [vmem:[%s2 + $0x20] sm:$0xff]
    %v54 = vld [vmem:[%s2 + $0x28] sm:$0xff]
    %v55 = vld [vmem:[%s2 + $0x30] sm:$0x3]
    %v56 = vld [vmem:[#allocation2] sm:$0x3]
    %vm57 = vcmp.eq.s32.totalorder %v33, 0
    %vm58 = vcmp.eq.s32.totalorder %v34, 0
    %v59 = vsel %vm57, 1, 0
    %v60 = vsel %vm58, 1, 0
    %61 = vset.pattern.permute.xlu0 1
    %62 = vperm.xlu0 %61, %v59
    %v63 = vpop.permute.xlu0 %62
    %64 = vset.pattern.permute.xlu0 1
    %65 = vperm.xlu0 %64, %v60
    %v66 = vpop.permute.xlu0 %65
    %vm67 = vcmp.eq.s32.totalorder %v63, 1
    %vm68 = vcmp.eq.s32.totalorder %v66, 1
    %v69 = vperm.slane %v56, 0
    %v70 = vperm.slane %v56, 1
    %v71 = vsel %vm67, %v69, %v70
    %v72 = vsel %vm68, %v69, %v70
    %vm73 = vcmask 408576
    %v75 = vsel %vm73, %v47, 0
    %v78 = vsel %vm73, %v48, 0
    %vm80 = vcmask 1041408
    %v82 = vsel %vm80, %v55, 0
    %84 = vmatpush.msra.mxu0 0.0
    %85 = vmatpush.msra.mxu0 0.0
    %86 = vmatpush.msra.mxu0 0.0
    %87 = vmatpush.msra.mxu0 0.0
    %88 = vmatpush.msra.mxu0 0.0
    %89 = vmatpush.msra.mxu0 0.0
    %90 = vmatpush.msra.mxu0 0.0
    %91 = vmatpush.msra.mxu0 0.0
    %92 = vmatpush.msra.mxu0 0.0
    %93 = vmatpush.msra.mxu0 %v82
    %94 = vmatpush.msra.mxu0 %v54
    %95 = vmatpush.msra.mxu0 %v53
    %96 = vmatpush.msra.mxu0 %v52
    %97 = vmatpush.msra.mxu0 %v51
    %98 = vmatpush.msra.mxu0 %v50
    %99 = vmatpush.msra.mxu0 %v49
    %100 = vmatmul.f32.gmra.mxu0 %v75
    %v101 = vpop.f32.mrf.mxu0
    %v102 = vadd.f32 %v71, %v101
    %103 = vmatmul.f32.gmra.mxu0 %v78
    %v104 = vpop.f32.mrf.mxu0
    %v105 = vadd.f32 %v72, %v104
    %106 = vdwg.mxu0
    %v107 = vld [vmem:[#allocation2 + $0x8] sm:$0xff]
    %v108 = vadd.f32 %v102, %v107
    %v109 = vadd.f32 %v105, %v107
    %v110 = vld [vmem:[#allocation2 + $0x10] sm:$0x1]
    %v111 = vld [vmem:[#allocation2 + $0x18] sm:$0x1]
    %vm112 = vcmask 261120
    %v113 = vsel %vm112, %v108, 0.0
    %114 = vadd.xlane.f32.xlu0 %v113
    %v115 = vpop.xlane.xlu0 %114
    %v116 = vsel %vm112, %v109, 0.0
    %117 = vadd.xlane.f32.xlu0 %v116
    %v118 = vpop.xlane.xlu0 %117
    %v119 = vrcp.pop 32.0
    %v120 = vmul.f32 32.0, %v119
    %v121 = vsub.f32 1.0, %v120
    %v122 = vmul.f32 %v119, %v121
    %v123 = vadd.f32 %v119, %v122
    %vm124 = vweird.f32 %v119
    %v125 = vsel %vm124, %v119, %v123
    %v126 = vmul.f32 %v115, %v125
    %v127 = vmul.f32 %v118, %v125
    %v128 = vsub.f32 %v108, %v126
    %v129 = vsub.f32 %v109, %v127
    %v130 = vmul.f32 %v128, %v128
    %v131 = vmul.f32 %v129, %v129
    %v132 = vsel %vm112, %v130, 0.0
    %133 = vadd.xlane.f32.xlu0 %v132
    %v134 = vpop.xlane.xlu0 %133
    %v135 = vsel %vm112, %v131, 0.0
    %136 = vadd.xlane.f32.xlu0 %v135
    %v137 = vpop.xlane.xlu0 %136
    %v138 = vmul.f32 %v134, %v125
    %v139 = vmul.f32 %v137, %v125
    %v140 = vadd.f32 %v138, 1e-12
    %v141 = vadd.f32 %v139, 1e-12
    %v142 = vrsqrt.pop %v140
    %v143 = vmul.f32 %v142, %v140
    %v144 = vmul.f32 %v143, %v142
    %v145 = vmul.f32 0.5, %v144
    %v146 = vsub.f32 1.5, %v145
    %v147 = vmul.f32 %v142, %v146
    %vm148 = vweird.f32 %v140
    %vm149 = vweird.f32 %v142
    %vm150 = vmor %vm148, %vm149
    %v151 = vsel %vm150, %v142, %v147
    %v152 = vrsqrt.pop %v141
    %v153 = vmul.f32 %v152, %v141
    %v154 = vmul.f32 %v153, %v152
    %v155 = vmul.f32 0.5, %v154
    %v156 = vsub.f32 1.5, %v155
    %v157 = vmul.f32 %v152, %v156
    %vm158 = vweird.f32 %v141
    %vm159 = vweird.f32 %v152
    %vm160 = vmor %vm158, %vm159
    %v161 = vsel %vm160, %v152, %v157
    %v162 = vmul.f32 %v128, %v151
    %v163 = vmul.f32 %v129, %v161
    %v164 = vperm.slane %v110, 0
    %v165 = vmul.f32 %v162, %v164
    %v166 = vmul.f32 %v163, %v164
    %v167 = vperm.slane %v111, 0
    %v168 = vadd.f32 %v165, %v167
    %v169 = vadd.f32 %v166, %v167
    %v170 = vld [vmem:[#allocation2 + $0x20] sm:$0xff]
    %v171 = vld [vmem:[#allocation2 + $0x28] sm:$0xff]
    %v172 = vld [vmem:[#allocation2 + $0x30] sm:$0xff]
    %v173 = vld [vmem:[#allocation2 + $0x38] sm:$0xff]
    %v174 = vld [vmem:[#allocation2 + $0x40] sm:$0x1]
    %v175 = vperm.slane %v174, 0
    %v178 = vrot.slane %v169, 7
    %vm179 = vcmask 1041409
    %v180 = vsel %vm179, %v178, %v168
    %v181 = vsel %vm112, %v180, 0
    %183 = vmatpush.msra.mxu0 0.0
    %184 = vmatpush.msra.mxu0 0.0
    %185 = vmatpush.msra.mxu0 0.0
    %186 = vmatpush.msra.mxu0 0.0
    %187 = vmatpush.msra.mxu0 0.0
    %188 = vmatpush.msra.mxu0 0.0
    %189 = vmatpush.msra.mxu0 0.0
    %190 = vmatpush.msra.mxu0 0.0
    %191 = vmatpush.msra.mxu0 0.0
    %192 = vmatpush.msra.mxu0 0.0
    %193 = vmatpush.msra.mxu0 0.0
    %194 = vmatpush.msra.mxu0 0.0
    %195 = vmatpush.msra.mxu0 %v173
    %196 = vmatpush.msra.mxu0 %v172
    %197 = vmatpush.msra.mxu0 %v171
    %198 = vmatpush.msra.mxu0 %v170
    %199 = vmatmul.f32.gmra.mxu0 %v181
    %v200 = vpop.f32.mrf.mxu0
    %v201 = vadd.f32 %v175, %v200
    %202 = vdwg.mxu0
    %v203 = vld [vmem:[#allocation2 + $0x48] sm:$0xff]
    %v204 = vld [vmem:[#allocation2 + $0x50] sm:$0xff]
    %v205 = vld [vmem:[#allocation2 + $0x58] sm:$0xff]
    %v206 = vld [vmem:[#allocation2 + $0x60] sm:$0xff]
    %v207 = vld [vmem:[#allocation2 + $0x68] sm:$0x1]
    %v208 = vperm.slane %v207, 0
    %v209 = vsel %vm112, %v168, 0
    %v211 = vsel %vm112, %v169, 0
    %213 = vmatpush.msra.mxu0 0.0
    %214 = vmatpush.msra.mxu0 0.0
    %215 = vmatpush.msra.mxu0 0.0
    %216 = vmatpush.msra.mxu0 0.0
    %217 = vmatpush.msra.mxu0 0.0
    %218 = vmatpush.msra.mxu0 0.0
    %219 = vmatpush.msra.mxu0 0.0
    %220 = vmatpush.msra.mxu0 0.0
    %221 = vmatpush.msra.mxu0 0.0
    %222 = vmatpush.msra.mxu0 0.0
    %223 = vmatpush.msra.mxu0 0.0
    %224 = vmatpush.msra.mxu0 0.0
    %225 = vmatpush.msra.mxu0 %v206
    %226 = vmatpush.msra.mxu0 %v205
    %227 = vmatpush.msra.mxu0 %v204
    %228 = vmatpush.msra.mxu0 %v203
    %229 = vmatmul.f32.gmra.mxu0 %v209
    %v230 = vpop.f32.mrf.mxu0
    %v231 = vadd.f32 %v208, %v230
    %232 = vmatmul.f32.gmra.mxu0 %v211
    %v233 = vpop.f32.mrf.mxu0
    %v234 = vadd.f32 %v208, %v233
    %235 = vdwg.mxu0
    %v236 = vld [vmem:[#allocation2 + $0x70] sm:$0xff]
    %v237 = vld [vmem:[#allocation2 + $0x78] sm:$0xff]
    %v238 = vld [vmem:[#allocation2 + $0x80] sm:$0xff]
    %v239 = vld [vmem:[#allocation2 + $0x88] sm:$0xff]
    %v240 = vld [vmem:[#allocation2 + $0x90] sm:$0x1]
    %v241 = vperm.slane %v240, 0
    %242 = vmatpush.msra.mxu0 0.0
    %243 = vmatpush.msra.mxu0 0.0
    %244 = vmatpush.msra.mxu0 0.0
    %245 = vmatpush.msra.mxu0 0.0
    %246 = vmatpush.msra.mxu0 0.0
    %247 = vmatpush.msra.mxu0 0.0
    %248 = vmatpush.msra.mxu0 0.0
    %249 = vmatpush.msra.mxu0 0.0
    %250 = vmatpush.msra.mxu0 0.0
    %251 = vmatpush.msra.mxu0 0.0
    %252 = vmatpush.msra.mxu0 0.0
    %253 = vmatpush.msra.mxu0 0.0
    %254 = vmatpush.msra.mxu0 %v239
    %255 = vmatpush.msra.mxu0 %v238
    %256 = vmatpush.msra.mxu0 %v237
    %257 = vmatpush.msra.mxu0 %v236
    %258 = vmatmul.f32.gmra.mxu0 %v209
    %v259 = vpop.f32.mrf.mxu0
    %v260 = vadd.f32 %v241, %v259
    %261 = vmatmul.f32.gmra.mxu0 %v211
    %v262 = vpop.f32.mrf.mxu0
    %v263 = vadd.f32 %v241, %v262
    %264 = vdwg.mxu0
    %v266 = vrot.slane %v201, 1
    %v267 = vsel %vm112, %v201, 0
    %v270 = vsel %vm112, %v231, 0
    %272 = vmatpush.xpose.msra.mxu0 0.0
    %273 = vmatpush.xpose.msra.mxu0 0.0
    %274 = vmatpush.xpose.msra.mxu0 0.0
    %275 = vmatpush.xpose.msra.mxu0 0.0
    %276 = vmatpush.xpose.msra.mxu0 0.0
    %277 = vmatpush.xpose.msra.mxu0 0.0
    %278 = vmatpush.xpose.msra.mxu0 0.0
    %279 = vmatpush.xpose.msra.mxu0 0.0
    %280 = vmatpush.xpose.msra.mxu0 0.0
    %281 = vmatpush.xpose.msra.mxu0 0.0
    %282 = vmatpush.xpose.msra.mxu0 0.0
    %283 = vmatpush.xpose.msra.mxu0 0.0
    %284 = vmatpush.xpose.msra.mxu0 0.0
    %285 = vmatpush.xpose.msra.mxu0 0.0
    %286 = vmatpush.xpose.msra.mxu0 0.0
    %287 = vmatpush.xpose.msra.mxu0 %v270
    %288 = vmatmul.f32.gmra.mxu0 %v267
    %v289 = vpop.f32.mrf.mxu0
    %v290 = vadd.f32 0.0, %v289
    %291 = vdwg.mxu0
    %v292 = vsel %vm112, %v266, 0
    %v295 = vsel %vm112, %v234, 0
    %297 = vmatpush.xpose.msra.mxu0 0.0
    %298 = vmatpush.xpose.msra.mxu0 0.0
    %299 = vmatpush.xpose.msra.mxu0 0.0
    %300 = vmatpush.xpose.msra.mxu0 0.0
    %301 = vmatpush.xpose.msra.mxu0 0.0
    %302 = vmatpush.xpose.msra.mxu0 0.0
    %303 = vmatpush.xpose.msra.mxu0 0.0
    %304 = vmatpush.xpose.msra.mxu0 0.0
    %305 = vmatpush.xpose.msra.mxu0 0.0
    %306 = vmatpush.xpose.msra.mxu0 0.0
    %307 = vmatpush.xpose.msra.mxu0 0.0
    %308 = vmatpush.xpose.msra.mxu0 0.0
    %309 = vmatpush.xpose.msra.mxu0 0.0
    %310 = vmatpush.xpose.msra.mxu0 0.0
    %311 = vmatpush.xpose.msra.mxu0 0.0
    %312 = vmatpush.xpose.msra.mxu0 %v295
    %313 = vmatmul.f32.gmra.mxu0 %v292
    %v314 = vpop.f32.mrf.mxu0
    %v315 = vadd.f32 0.0, %v314
    %316 = vdwg.mxu0
    %v317 = vmul.f32 %v290, 0.17677669
    %v318 = vmul.f32 %v315, 0.17677669
    %v319 = vld [vmem:[%s1] sm:$0x3]
    %v320 = vrot.slane %v319, 1
    %321 = vset.pattern.permute.xlu0 0
    %322 = vperm.xlu0 %321, %v319
    %v323 = vpop.permute.xlu0 %322
    %v324 = vperm.slane %v323, 0
    %325 = vset.pattern.permute.xlu0 0
    %326 = vperm.xlu0 %325, %v320
    %v327 = vpop.permute.xlu0 %326
    %v328 = vperm.slane %v327, 0
    %vm329 = vcmp.lt.s32.totalorder %v36, %v324
    %vm330 = vcmp.lt.s32.totalorder %v36, %v328
    %v331 = vsel %vm329, %v317, -1e+09
    %v332 = vsel %vm330, %v318, -1e+09
    %vm333 = vcmask 57344
    %v334 = vsel %vm333, %v331, -inf
    %335 = vmax.xlane.f32.xlu0 %v334
    %v336 = vpop.xlane.xlu0 %335
    %v337 = vsel %vm333, %v332, -inf
    %338 = vmax.xlane.f32.xlu0 %v337
    %v339 = vpop.xlane.xlu0 %338
    %v340 = vsub.f32 %v331, %v336
    %v341 = vsub.f32 %v332, %v339
    %v342 = vmul.f32 %v340, 1.442695
    %v343 = vpow.pop %v342
    %v344 = vmul.f32 %v341, 1.442695
    %v345 = vpow.pop %v344
    %v346 = vsel %vm333, %v343, 0.0
    %347 = vadd.xlane.f32.xlu0 %v346
    %v348 = vpop.xlane.xlu0 %347
    %v349 = vsel %vm333, %v345, 0.0
    %350 = vadd.xlane.f32.xlu0 %v349
    %v351 = vpop.xlane.xlu0 %350
    %v352 = vrcp.pop %v348
    %v353 = vrcp.pop %v351
    %v354 = vmul.f32 %v343, %v352
    %v355 = vmul.f32 %v345, %v353
    %vm356 = vcmask 64512
    %v358 = vsel %vm356, %v354, 0
    %360 = vmatpush.msra.mxu0 0.0
    %361 = vmatpush.msra.mxu0 0.0
    %362 = vmatpush.msra.mxu0 0.0
    %363 = vmatpush.msra.mxu0 0.0
    %364 = vmatpush.msra.mxu0 0.0
    %365 = vmatpush.msra.mxu0 0.0
    %366 = vmatpush.msra.mxu0 0.0
    %367 = vmatpush.msra.mxu0 0.0
    %368 = vmatpush.msra.mxu0 0.0
    %369 = vmatpush.msra.mxu0 0.0
    %370 = vmatpush.msra.mxu0 0.0
    %371 = vmatpush.msra.mxu0 0.0
    %372 = vmatpush.msra.mxu0 0.0
    %373 = vmatpush.msra.mxu0 0.0
    %374 = vmatpush.msra.mxu0 0.0
    %375 = vmatpush.msra.mxu0 %v260
    %376 = vmatmul.f32.gmra.mxu0 %v358
    %v377 = vpop.f32.mrf.mxu0
    %v378 = vadd.f32 0.0, %v377
    %379 = vdwg.mxu0
    %v381 = vsel %vm356, %v355, 0
    %383 = vmatpush.msra.mxu0 0.0
    %384 = vmatpush.msra.mxu0 0.0
    %385 = vmatpush.msra.mxu0 0.0
    %386 = vmatpush.msra.mxu0 0.0
    %387 = vmatpush.msra.mxu0 0.0
    %388 = vmatpush.msra.mxu0 0.0
    %389 = vmatpush.msra.mxu0 0.0
    %390 = vmatpush.msra.mxu0 0.0
    %391 = vmatpush.msra.mxu0 0.0
    %392 = vmatpush.msra.mxu0 0.0
    %393 = vmatpush.msra.mxu0 0.0
    %394 = vmatpush.msra.mxu0 0.0
    %395 = vmatpush.msra.mxu0 0.0
    %396 = vmatpush.msra.mxu0 0.0
    %397 = vmatpush.msra.mxu0 0.0
    %398 = vmatpush.msra.mxu0 %v263
    %399 = vmatmul.f32.gmra.mxu0 %v381
    %v400 = vpop.f32.mrf.mxu0
    %v401 = vadd.f32 0.0, %v400
    %402 = vdwg.mxu0
    %v403 = vld [vmem:[#allocation2 + $0x98] sm:$0xff]
    %v404 = vld [vmem:[#allocation2 + $0xa0] sm:$0xff]
    %v405 = vld [vmem:[#allocation2 + $0xa8] sm:$0xff]
    %v406 = vld [vmem:[#allocation2 + $0xb0] sm:$0xff]
    %v407 = vld [vmem:[#allocation2 + $0xb8] sm:$0x1]
    %v408 = vperm.slane %v407, 0
    %v411 = vrot.slane %v401, 7
    %v412 = vsel %vm179, %v411, %v378
    %v413 = vsel %vm112, %v412, 0
    %415 = vmatpush.msra.mxu0 0.0
    %416 = vmatpush.msra.mxu0 0.0
    %417 = vmatpush.msra.mxu0 0.0
    %418 = vmatpush.msra.mxu0 0.0
    %419 = vmatpush.msra.mxu0 0.0
    %420 = vmatpush.msra.mxu0 0.0
    %421 = vmatpush.msra.mxu0 0.0
    %422 = vmatpush.msra.mxu0 0.0
    %423 = vmatpush.msra.mxu0 0.0
    %424 = vmatpush.msra.mxu0 0.0
    %425 = vmatpush.msra.mxu0 0.0
    %426 = vmatpush.msra.mxu0 0.0
    %427 = vmatpush.msra.mxu0 %v406
    %428 = vmatpush.msra.mxu0 %v405
    %429 = vmatpush.msra.mxu0 %v404
    %430 = vmatpush.msra.mxu0 %v403
    %431 = vmatmul.f32.gmra.mxu0 %v413
    %v432 = vpop.f32.mrf.mxu0
    %v433 = vadd.f32 %v408, %v432
    %434 = vdwg.mxu0
    %v436 = vrot.slane %v433, 1
    %v439 = vadd.f32 %v168, %v433
    %v440 = vadd.f32 %v169, %v436
    %v441 = vld [vmem:[#allocation2 + $0xc0] sm:$0x1]
    %v442 = vld [vmem:[#allocation2 + $0xc8] sm:$0x1]
    %v445 = vrot.slane %v440, 7
    %v446 = vsel %vm179, %v445, %v439
    %vm448 = vcmask 254976
    %v449 = vsel %vm448, %v446, 0.0
    %450 = vadd.xlane.f32.xlu0 %v449
    %v451 = vpop.xlane.xlu0 %450
    %v452 = vmul.f32 %v451, %v125
    %v454 = vrot.slane %v452, 1
    %v457 = vsub.f32 %v439, %v452
    %v458 = vsub.f32 %v440, %v454
    %v459 = vmul.f32 %v457, %v457
    %v460 = vmul.f32 %v458, %v458
    %v463 = vrot.slane %v460, 7
    %v464 = vsel %vm179, %v463, %v459
    %v466 = vsel %vm448, %v464, 0.0
    %467 = vadd.xlane.f32.xlu0 %v466
    %v468 = vpop.xlane.xlu0 %467
    %v469 = vmul.f32 %v468, %v125
    %v470 = vadd.f32 %v469, 1e-12
    %v471 = vrsqrt.pop %v470
    %v472 = vmul.f32 %v471, %v470
    %v473 = vmul.f32 %v472, %v471
    %v474 = vmul.f32 0.5, %v473
    %v475 = vsub.f32 1.5, %v474
    %v476 = vmul.f32 %v471, %v475
    %vm477 = vweird.f32 %v470
    %vm478 = vweird.f32 %v471
    %vm479 = vmor %vm477, %vm478
    %v480 = vsel %vm479, %v471, %v476
    %v482 = vrot.slane %v480, 1
    %v485 = vmul.f32 %v457, %v480
    %v486 = vmul.f32 %v458, %v482
    %v487 = vperm.slane %v441, 0
    %v488 = vmul.f32 %v485, %v487
    %v489 = vmul.f32 %v486, %v487
    %v490 = vperm.slane %v442, 0
    %v491 = vadd.f32 %v488, %v490
    %v492 = vadd.f32 %v489, %v490
    %v493 = vld [vmem:[#allocation2 + $0xd0] sm:$0xff]
    %v494 = vld [vmem:[#allocation2 + $0xd8] sm:$0xff]
    %v495 = vld [vmem:[#allocation2 + $0xe0] sm:$0xff]
    %v496 = vld [vmem:[#allocation2 + $0xe8] sm:$0xff]
    %v497 = vld [vmem:[#allocation2 + $0xf0] sm:$0x1]
    %v498 = vperm.slane %v497, 0
    %v501 = vrot.slane %v492, 7
    %v502 = vsel %vm179, %v501, %v491
    %v503 = vsel %vm112, %v502, 0
    %505 = vmatpush.msra.mxu0 0.0
    %506 = vmatpush.msra.mxu0 0.0
    %507 = vmatpush.msra.mxu0 0.0
    %508 = vmatpush.msra.mxu0 0.0
    %509 = vmatpush.msra.mxu0 0.0
    %510 = vmatpush.msra.mxu0 0.0
    %511 = vmatpush.msra.mxu0 0.0
    %512 = vmatpush.msra.mxu0 0.0
    %513 = vmatpush.msra.mxu0 0.0
    %514 = vmatpush.msra.mxu0 0.0
    %515 = vmatpush.msra.mxu0 0.0
    %516 = vmatpush.msra.mxu0 0.0
    %517 = vmatpush.msra.mxu0 %v496
    %518 = vmatpush.msra.mxu0 %v495
    %519 = vmatpush.msra.mxu0 %v494
    %520 = vmatpush.msra.mxu0 %v493
    %521 = vmatmul.f32.gmra.mxu0 %v503
    %v522 = vpop.f32.mrf.mxu0
    %v523 = vadd.f32 %v498, %v522
    %524 = vdwg.mxu0
    %v525 = vmul.f32 %v523, 0.5
    %v526 = vmul.f32 %v523, 0.044715
    %v527 = vmul.f32 %v526, %v523
    %v528 = vmul.f32 %v527, %v523
    %v529 = vadd.f32 %v523, %v528
    %v530 = vmul.f32 %v529, 0.7978846
    %v531 = vtanh.pop %v530
    %v532 = vadd.f32 %v531, 1.0
    %v533 = vmul.f32 %v525, %v532
    %v534 = vld [vmem:[#allocation2 + $0xf8] sm:$0xff]
    %v535 = vld [vmem:[#allocation2 + $0x100] sm:$0xff]
    %v536 = vld [vmem:[#allocation2 + $0x108] sm:$0xff]
    %v537 = vld [vmem:[#allocation2 + $0x110] sm:$0xff]
    %v538 = vld [vmem:[#allocation2 + $0x118] sm:$0xff]
    %v539 = vld [vmem:[#allocation2 + $0x120] sm:$0xff]
    %v540 = vld [vmem:[#allocation2 + $0x128] sm:$0xff]
    %v541 = vld [vmem:[#allocation2 + $0x130] sm:$0xff]
    %v542 = vld [vmem:[#allocation2 + $0x138] sm:$0xff]
    %v543 = vld [vmem:[#allocation2 + $0x140] sm:$0xff]
    %v544 = vld [vmem:[#allocation2 + $0x148] sm:$0xff]
    %v545 = vld [vmem:[#allocation2 + $0x150] sm:$0xff]
    %v546 = vld [vmem:[#allocation2 + $0x158] sm:$0xff]
    %v547 = vld [vmem:[#allocation2 + $0x160] sm:$0xff]
    %v548 = vld [vmem:[#allocation2 + $0x168] sm:$0xff]
    %v549 = vld [vmem:[#allocation2 + $0x170] sm:$0xff]
    %v550 = vld [vmem:[#allocation2 + $0x178] sm:$0x1]
    %v551 = vperm.slane %v550, 0
    %552 = vmatpush.msra.mxu0 %v549
    %553 = vmatpush.msra.mxu0 %v548
    %554 = vmatpush.msra.mxu0 %v547
    %555 = vmatpush.msra.mxu0 %v546
    %556 = vmatpush.msra.mxu0 %v545
    %557 = vmatpush.msra.mxu0 %v544
    %558 = vmatpush.msra.mxu0 %v543
    %559 = vmatpush.msra.mxu0 %v542
    %560 = vmatpush.msra.mxu0 %v541
    %561 = vmatpush.msra.mxu0 %v540
    %562 = vmatpush.msra.mxu0 %v539
    %563 = vmatpush.msra.mxu0 %v538
    %564 = vmatpush.msra.mxu0 %v537
    %565 = vmatpush.msra.mxu0 %v536
    %566 = vmatpush.msra.mxu0 %v535
    %567 = vmatpush.msra.mxu0 %v534
    %568 = vmatmul.f32.gmra.mxu0 %v533
    %v569 = vpop.f32.mrf.mxu0
    %v570 = vadd.f32 %v551, %v569
    %571 = vdwg.mxu0
    %v573 = vrot.slane %v570, 1
    %v576 = vadd.f32 %v491, %v570
    %v577 = vadd.f32 %v492, %v573
    %v578 = vld [vmem:[#allocation2 + $0x180] sm:$0x1]
    %v579 = vld [vmem:[#allocation2 + $0x188] sm:$0x1]
    %v582 = vrot.slane %v577, 7
    %v583 = vsel %vm179, %v582, %v576
    %v585 = vsel %vm448, %v583, 0.0
    %586 = vadd.xlane.f32.xlu0 %v585
    %v587 = vpop.xlane.xlu0 %586
    %v588 = vmul.f32 %v587, %v125
    %v590 = vrot.slane %v588, 1
    %v593 = vsub.f32 %v576, %v588
    %v594 = vsub.f32 %v577, %v590
    %v595 = vmul.f32 %v593, %v593
    %v596 = vmul.f32 %v594, %v594
    %v599 = vrot.slane %v596, 7
    %v600 = vsel %vm179, %v599, %v595
    %v602 = vsel %vm448, %v600, 0.0
    %603 = vadd.xlane.f32.xlu0 %v602
    %v604 = vpop.xlane.xlu0 %603
    %v605 = vmul.f32 %v604, %v125
    %v606 = vadd.f32 %v605, 1e-12
    %v607 = vrsqrt.pop %v606
    %v608 = vmul.f32 %v607, %v606
    %v609 = vmul.f32 %v608, %v607
    %v610 = vmul.f32 0.5, %v609
    %v611 = vsub.f32 1.5, %v610
    %v612 = vmul.f32 %v607, %v611
    %vm613 = vweird.f32 %v606
    %vm614 = vweird.f32 %v607
    %vm615 = vmor %vm613, %vm614
    %v616 = vsel %vm615, %v607, %v612
    %v618 = vrot.slane %v616, 1
    %v621 = vmul.f32 %v593, %v616
    %v622 = vmul.f32 %v594, %v618
    %v623 = vperm.slane %v578, 0
    %v624 = vmul.f32 %v621, %v623
    %v625 = vmul.f32 %v622, %v623
    %v626 = vperm.slane %v579, 0
    %v627 = vadd.f32 %v624, %v626
    %v628 = vadd.f32 %v625, %v626
    %v629 = vld [vmem:[#allocation2 + $0x190] sm:$0xff]
    %v630 = vld [vmem:[#allocation2 + $0x198] sm:$0xff]
    %v631 = vld [vmem:[#allocation2 + $0x1a0] sm:$0xff]
    %v632 = vld [vmem:[#allocation2 + $0x1a8] sm:$0xff]
    %v633 = vld [vmem:[#allocation2 + $0x1b0] sm:$0x1]
    %v634 = vperm.slane %v633, 0
    %v637 = vrot.slane %v628, 7
    %v638 = vsel %vm179, %v637, %v627
    %v639 = vsel %vm112, %v638, 0
    %641 = vmatpush.msra.mxu0 0.0
    %642 = vmatpush.msra.mxu0 0.0
    %643 = vmatpush.msra.mxu0 0.0
    %644 = vmatpush.msra.mxu0 0.0
    %645 = vmatpush.msra.mxu0 0.0
    %646 = vmatpush.msra.mxu0 0.0
    %647 = vmatpush.msra.mxu0 0.0
    %648 = vmatpush.msra.mxu0 0.0
    %649 = vmatpush.msra.mxu0 0.0
    %650 = vmatpush.msra.mxu0 0.0
    %651 = vmatpush.msra.mxu0 0.0
    %652 = vmatpush.msra.mxu0 0.0
    %653 = vmatpush.msra.mxu0 %v632
    %654 = vmatpush.msra.mxu0 %v631
    %655 = vmatpush.msra.mxu0 %v630
    %656 = vmatpush.msra.mxu0 %v629
    %657 = vmatmul.f32.gmra.mxu0 %v639
    %v658 = vpop.f32.mrf.mxu0
    %v659 = vadd.f32 %v634, %v658
    %660 = vdwg.mxu0
    %v661 = vtanh.pop %v659
    %v662 = vsel %vm80, %v661, 0.0
    %v663 = vld [vmem:[#allocation2 + $0x1b8] sm:$0xff]
    %v664 = vld [vmem:[#allocation2 + $0x1c0] sm:$0xff]
    %v665 = vld [vmem:[#allocation2 + $0x1c8] sm:$0xff]
    %v666 = vld [vmem:[#allocation2 + $0x1d0] sm:$0xff]
    %v667 = vld [vmem:[#allocation2 + $0x1d8] sm:$0x1]
    %v668 = vperm.slane %v667, 0
    %v670 = vsel %vm112, %v662, 0
    %672 = vmatpush.msra.mxu0 0.0
    %673 = vmatpush.msra.mxu0 0.0
    %674 = vmatpush.msra.mxu0 0.0
    %675 = vmatpush.msra.mxu0 0.0
    %676 = vmatpush.msra.mxu0 0.0
    %677 = vmatpush.msra.mxu0 0.0
    %678 = vmatpush.msra.mxu0 0.0
    %679 = vmatpush.msra.mxu0 0.0
    %680 = vmatpush.msra.mxu0 0.0
    %681 = vmatpush.msra.mxu0 0.0
    %682 = vmatpush.msra.mxu0 0.0
    %683 = vmatpush.msra.mxu0 0.0
    %684 = vmatpush.msra.mxu0 %v666
    %685 = vmatpush.msra.mxu0 %v665
    %686 = vmatpush.msra.mxu0 %v664
    %687 = vmatpush.msra.mxu0 %v663
    %688 = vmatmul.f32.gmra.mxu0 %v670
    %v689 = vpop.f32.mrf.mxu0
    %v690 = vadd.f32 %v668, %v689
    %691 = vdwg.mxu0
    %692 = vst [vmem:[%s4] sm:$0xff] %v690
    // Predicated region
    $region22: #{classifier_forward.1} parent=1 // pred_check
      _
    $region23: #{classifier_forward.1} parent=1 // pred_check_branch
      %694 = sbr.rel (0) target = $region25
    $region24: #{classifier_forward.1} parent=1 // pred_region
      _
    $region25: #{classifier_forward.1} parent=1 // pred_fallthru
      _
    // Predicated region
    $region26: #{classifier_forward.1} parent=1 // pred_check
      _
    $region27: #{classifier_forward.1} parent=1 // pred_check_branch
      %696 = sbr.rel (0) target = $region29
    $region28: #{classifier_forward.1} parent=1 // pred_region
      _
    $region29: #{classifier_forward.1} parent=1 // pred_fallthru
      _
    %697 = vsyncpa [#allocation3], 1

</llo_original>
